<compile_context>
chip_gen: v6e
topology: v6e:2x2x1
jax: 0.10.0
libtpu: 0.0.40
codegen_flags: <defaults>
</compile_context>

<pallas_src>
import jax
import jax.numpy as jnp
from jax.experimental import pallas as pl
from jax.experimental.pallas import tpu as pltpu

_LANE = 128
_SUBLANE = 8


def _round_up(x: int, m: int) -> int:
    return (x + m - 1) // m * m


def _ms2_output_kernel(x_ref, w_ref, b_ref, o_ref):
    # x: (TM, K), w: (K, Np), b: (1, Np) f32 -> o: (TM, n_out), n_out <= Np.
    y = jnp.dot(x_ref[...], w_ref[...], preferred_element_type=jnp.float32)
    y = jnp.maximum(y + b_ref[...], 0.0)
    n_out = o_ref.shape[-1]
    # Narrow store: only the real columns go back to HBM. The zero-padded
    # columns exist only in VMEM (lane-dense MXU RHS).
    o_ref[...] = y[:, :n_out].astype(o_ref.dtype)


def fuse_ms2_output_params(head_weights, head_biases, param_dtype=None):
    """Fuse per-head nn.Linear params once at parameter-load time.

    head_weights: list of (out_feats, in_features) arrays (PyTorch layout),
                  ordered [main, *glycan heads] (dict insertion order).
    head_biases:  list of (out_feats,) arrays.
    Returns (W_pad, b_pad, n_out): W_pad (K, N_pad) in `param_dtype` (or the
    input dtype), b_pad (1, N_pad) in f32, with N_pad a multiple of 128
    (lane-dense MXU RHS, zero-padded columns), and n_out the true
    concatenated output width.
    """
    W = jnp.concatenate([jnp.asarray(w).T for w in head_weights], axis=-1)  # (K, N)
    b = jnp.concatenate([jnp.asarray(x) for x in head_biases], axis=-1)[None, :]
    if param_dtype is not None:
        W = W.astype(param_dtype)
    # Bias kept in f32: the kernel accumulates/adds in f32 regardless of the
    # W/x dtype, so no per-step cast is needed in the body.
    b = b.astype(jnp.float32)
    _, n_out = W.shape
    n_pad = _round_up(max(n_out, _LANE), _LANE)
    if n_pad != n_out:
        W = jnp.pad(W, ((0, 0), (0, n_pad - n_out)))
        b = jnp.pad(b, ((0, 0), (0, n_pad - n_out)))
    return W, b, n_out


def _vmem_caps():
    """Generation-aware VMEM budget / limit (v7x has 64 MiB, v5e/v6e 128 MiB)."""
    try:
        cap = int(pltpu.get_tpu_info().vmem_capacity_bytes)
    except Exception:  # pragma: no cover - conservative fallback
        cap = 128 << 20
    budget = cap // 4      # tile-selection budget: 32 MiB (v5e/v6e), 16 MiB (v7x)
    limit_cap = cap // 2   # vmem_limit_bytes cap:   64 MiB (v5e/v6e), 32 MiB (v7x)
    return budget, limit_cap


def gpeptide_ms2_output(feature, w_fused, b_fused, n_out, *,
                        tm_max=8192, min_pallas_rows=2048, compute_dtype=None):
    """Forward pass: relu(feature @ W_fused + b_fused) truncated to n_out cols.

    feature: (..., in_features); w_fused: (in_features, N_pad);
    b_fused: (1, N_pad) f32; returns (..., n_out) in feature.dtype.
    compute_dtype (e.g. jnp.bfloat16) optionally casts the activation stream;
    accumulation stays f32.
    """
    lead = feature.shape[:-1]
    K = feature.shape[-1]
    M = 1
    for d in lead:
        M *= d
    Np = w_fused.shape[-1]

    x2 = feature.reshape(M, K)
    if compute_dtype is not None:
        x2 = x2.astype(compute_dtype)

    # Small-M fallback: a single Pallas grid step is pure launch/DMA-setup
    # overhead; plain XLA fuses matmul+bias+ReLU for tiny inputs.
    if M < min_pallas_rows:
        y = jnp.maximum(
            jnp.dot(x2, w_fused, preferred_element_type=jnp.float32) + b_fused, 0.0)
        return y[:, :n_out].astype(feature.dtype).reshape(*lead, n_out)

    xb = jnp.dtype(x2.dtype).itemsize
    wb = jnp.dtype(w_fused.dtype).itemsize
    ob = jnp.dtype(feature.dtype).itemsize

    budget, limit_cap = _vmem_caps()
    resident = (K * Np * wb + Np * 4) * 2  # double-buffered resident W + b(f32)

    def step_bytes(t):
        # double-buffered streamed x tile + double-buffered narrow out tile
        return 2 * t * K * xb + 2 * t * n_out * ob + resident

    # Largest M tile (multiple of 8, <= tm_max) that fits the VMEM budget.
    tm = max(_SUBLANE, _round_up(min(tm_max, M), _SUBLANE))
    while tm > _SUBLANE and step_bytes(tm) > budget:
        tm = max(_SUBLANE, _round_up(tm // 2, _SUBLANE))
    # Megacore: ensure the parallel M axis has >= 2 grid steps so both
    # TensorCores (v7x) get work.
    if pl.cdiv(M, tm) < 2:
        tm = max(_SUBLANE, _round_up(pl.cdiv(M, 2), _SUBLANE))
    grid_m = pl.cdiv(M, tm)
    need = step_bytes(tm)
    vmem_limit = int(min(max(need + (2 << 20), 8 << 20), limit_cap))

    cost = pl.CostEstimate(
        flops=2 * M * K * Np,
        transcendentals=0,
        bytes_accessed=M * K * xb + (K * Np + Np) * wb + M * n_out * ob,
    )

    out = pl.pallas_call(
        _ms2_output_kernel,
        out_shape=jax.ShapeDtypeStruct((M, n_out), feature.dtype),
        grid_spec=pl.GridSpec(
            grid=(grid_m,),
            in_specs=[
                # x streams along M; ragged last tile handled by Pallas masking.
                pl.BlockSpec((tm, K), lambda i: (i, 0)),
                # W and b: constant block index -> resident in VMEM.
                pl.BlockSpec((K, Np), lambda i: (0, 0)),
                pl.BlockSpec((1, Np), lambda i: (0, 0)),
            ],
            # Narrow output block: last dim equals the full array dim (legal
            # even though n_out is not a multiple of 128).
            out_specs=pl.BlockSpec((tm, n_out), lambda i: (i, 0)),
        ),
        compiler_params=pltpu.CompilerParams(
            dimension_semantics=("parallel",),
            vmem_limit_bytes=vmem_limit,
        ),
        cost_estimate=cost,
    )(x2, w_fused, b_fused)

    return out.reshape(*lead, n_out)


if __name__ == "__main__":
    # Synthetic config consistent with the module:
    #   fragment_type = ["b", "y"], fragment_charge = [1, 2]
    #     -> num_fragment_ion_types = 2 * 2 = 4
    #   fragment_glycan = ["Y", "B"] -> 2 glycan heads + 1 main = 3 heads
    #   loss_type = [] (empty, so no NotImplementedError branch)
    num_fragment_ion_types = 4
    num_heads = 3  # main + 2 glycan heads
    in_features = 32
    batch, seq = 2, 8

    key = jax.random.PRNGKey(0)
    k_x, k_x2, *k_params = jax.random.split(key, 2 + 2 * num_heads)

    feature = jax.random.normal(k_x, (batch, seq, in_features), dtype=jnp.float32)

    # Deterministic per-head parameter init (PyTorch nn.Linear layout).
    head_weights, head_biases = [], []
    for h in range(num_heads):
        w = 0.1 * jax.random.normal(
            k_params[2 * h], (num_fragment_ion_types, in_features), dtype=jnp.float32)
        bb = 0.05 * jax.random.normal(
            k_params[2 * h + 1], (num_fragment_ion_types,), dtype=jnp.float32)
        head_weights.append(w)
        head_biases.append(bb)

    # Fuse parameters once (hoisted out of the forward hot path).
    # (For a bf16 activation stream pass param_dtype=jnp.bfloat16 here and
    #  compute_dtype=jnp.bfloat16 below; f32 kept here for exact comparison.)
    W_fused, b_fused, n_out = fuse_ms2_output_params(head_weights, head_biases)

    def reference(x):
        heads = [jnp.maximum(x @ w.T + bb, 0.0)
                 for w, bb in zip(head_weights, head_biases)]
        return jnp.concatenate(heads, axis=-1)

    # 1) Small demo input forced through the Pallas path (min_pallas_rows=1).
    out_small = gpeptide_ms2_output(feature, W_fused, b_fused, n_out,
                                    min_pallas_rows=1)
    out_small = jax.block_until_ready(out_small)
    assert out_small.shape == (batch, seq, num_heads * num_fragment_ion_types)
    assert jnp.allclose(out_small, reference(feature), atol=1e-5, rtol=1e-5)

    # 2) Same small input through the default path (small-M XLA fallback).
    out_fb = jax.block_until_ready(
        gpeptide_ms2_output(feature, W_fused, b_fused, n_out))
    assert jnp.allclose(out_fb, reference(feature), atol=1e-5, rtol=1e-5)

    # 3) Larger input exercising the multi-step grid, megacore split and a
    #    ragged last tile (M = 4*523 = 2092 rows, grid_m = 2).
    feature_big = jax.random.normal(k_x2, (4, 523, in_features), dtype=jnp.float32)
    out_big = jax.block_until_ready(
        gpeptide_ms2_output(feature_big, W_fused, b_fused, n_out))
    assert out_big.shape == (4, 523, num_heads * num_fragment_ion_types)
    assert jnp.allclose(out_big, reference(feature_big), atol=1e-5, rtol=1e-5)

    print("KERNEL_OK")
</pallas_src>

<mosaic_0001>
module attributes {stable_mosaic.version = 11 : i64} {
  func.func @_ms2_output_kernel(%arg0: i32, %arg1: memref<8x32xf32, #tpu.memory_space<vmem>>, %arg2: memref<32x128xf32, #tpu.memory_space<vmem>>, %arg3: memref<1x128xf32, #tpu.memory_space<vmem>>, %arg4: memref<8x12xf32, #tpu.memory_space<vmem>>) attributes {dimension_semantics = [#tpu.dimension_semantics<parallel>], iteration_bounds = array<i64: 2>, scalar_prefetch = 0 : i64, scratch_operands = 0 : i64, tpu.core_type = #tpu.core_type<tc>, window_params = [{transform_indices = @transform_0, window_bounds = array<i64: 8, 32>}, {pipeline_mode = #tpu.pipeline_mode<synchronous>, transform_indices = @transform_1, window_bounds = array<i64: 32, 128>}, {pipeline_mode = #tpu.pipeline_mode<synchronous>, transform_indices = @transform_2, window_bounds = array<i64: 1, 128>}, {transform_indices = @transform_3, window_bounds = array<i64: 8, 12>}]} {
    %c0 = arith.constant 0 : index
    %c0_0 = arith.constant 0 : index
    %0 = vector.load %arg1[%c0, %c0_0] : memref<8x32xf32, #tpu.memory_space<vmem>>, vector<8x32xf32>
    %c0_1 = arith.constant 0 : index
    %c0_2 = arith.constant 0 : index
    %1 = vector.load %arg2[%c0_1, %c0_2] : memref<32x128xf32, #tpu.memory_space<vmem>>, vector<32x128xf32>
    %cst = arith.constant dense<0.000000e+00> : vector<8x128xf32>
    %2 = tpu.matmul %0, %1, %cst {dimension_numbers = #tpu.dot_dimension_numbers<[1], [0], [0], [1], [0, 0, 1, 1], [], []>} : vector<8x32xf32>, vector<32x128xf32>, vector<8x128xf32> -> vector<8x128xf32>
    %c0_3 = arith.constant 0 : index
    %c0_4 = arith.constant 0 : index
    %3 = vector.load %arg3[%c0_3, %c0_4] : memref<1x128xf32, #tpu.memory_space<vmem>>, vector<1x128xf32>
    %4 = vector.broadcast %3 : vector<1x128xf32> to vector<8x128xf32>
    %5 = arith.addf %2, %4 : vector<8x128xf32>
    %cst_5 = arith.constant 0.000000e+00 : f32
    %6 = vector.broadcast %cst_5 : f32 to vector<8x128xf32>
    %7 = arith.maximumf %5, %6 : vector<8x128xf32>
    %8 = vector.extract_strided_slice %7 {offsets = [0, 0], sizes = [8, 12], strides = [1, 1]} : vector<8x128xf32> to vector<8x12xf32>
    %c0_6 = arith.constant 0 : index
    %c0_7 = arith.constant 0 : index
    %9 = vector.load %arg4[%c0_6, %c0_7] : memref<8x12xf32, #tpu.memory_space<vmem>>, vector<8x12xf32>
    tpu.vector_store %arg4[%c0_6, %c0_7], %8 {strides = array<i32>} : memref<8x12xf32, #tpu.memory_space<vmem>>, vector<8x12xf32>,
    return
  }
  func.func @transform_0(%arg0: i32) -> (i32, i32) {
    %c0_i32 = arith.constant 0 : i32
    %c0_i32_0 = arith.constant 0 : i32
    return %arg0, %c0_i32 : i32, i32
  }
  func.func @transform_1(%arg0: i32) -> (i32, i32) {
    %c0_i32 = arith.constant 0 : i32
    %c0_i32_0 = arith.constant 0 : i32
    %c0_i32_1 = arith.constant 0 : i32
    return %c0_i32, %c0_i32_0 : i32, i32
  }
  func.func @transform_2(%arg0: i32) -> (i32, i32) {
    %c0_i32 = arith.constant 0 : i32
    %c0_i32_0 = arith.constant 0 : i32
    %c0_i32_1 = arith.constant 0 : i32
    return %c0_i32, %c0_i32_0 : i32, i32
  }
  func.func @transform_3(%arg0: i32) -> (i32, i32) {
    %c0_i32 = arith.constant 0 : i32
    %c0_i32_0 = arith.constant 0 : i32
    return %arg0, %c0_i32 : i32, i32
  }
}

</mosaic_0001>

<llo_original>
// kernel: tpu_custom_call.1
$region0: #{tpu_custom_call.1}
  #allocation0 [shape = 'u32[]', space=smem, size = 0x4, offset = 0x4, fixed_abs, tag = 'smem constant byte address 0x4 - core index']
  #allocation1 [shape = 'u32[144,128]{1,0:T(1,128)}', space=vmem, size = 0x12000, scoped, tag = 'internal scratch']
  %s0 = inlined_call_operand.hbm [shape: f32[16,32], index: 0, kind: input, shape index: {}]
  %s1 = inlined_call_operand.hbm [shape: f32[32,128], index: 1, kind: input, shape index: {}]
  %s2 = inlined_call_operand.vmem [shape: f32[1,128], index: 2, kind: input, shape index: {}]
  %s3 = inlined_call_operand.hbm [shape: f32[16,12], index: 3, kind: output, shape index: {}]
  %s4 = sld [smem:[#allocation0]]
  $region53: #{tpu_custom_call.1} parent=0
    _
  %s6 = ssub.s32 1, %s4
  %s7 = scalar_select 0, %s6, %s4
  $region1: #{tpu_custom_call.1} parent=0
    #allocation2 [shape = 'u8[8192]{0}', space=vmem, size = 0x2000, scoped, tag = 'input window, operand 0']
    #allocation3 [shape = 's32[2]{0}', space=sflag, size = 0x8, scoped, tag = 'scoped memory for tpu_custom_call.1']
    #allocation4 [shape = 's32[2]{0}', space=sflag, size = 0x8, scoped, tag = 'scoped memory for tpu_custom_call.1']
    #allocation5 [shape = 'u8[16384]{0}', space=vmem, size = 0x4000, scoped, tag = 'input window, operand 1, single buffered']
    #allocation6 [shape = 's32[1]{0}', space=sflag, size = 0x4, scoped, tag = 'scoped memory for tpu_custom_call.1']
    #allocation7 [shape = 'u8[8192]{0}', space=vmem, size = 0x2000, scoped, tag = 'output window, operand 0']
    %8 = vsyncpa [#allocation3], 0
    %s9 = scalar_lea.sflag [#allocation3], 1
    %10 = vsyncpa %s9, 0
    %11 = vsyncpa [#allocation6], 0
    %12 = vsyncpa [#allocation4], 0
    %s13 = scalar_lea.sflag [#allocation4], 1
    %14 = vsyncpa %s13, 0
    loop: start=0, step=1, limit=4
    $region2: #{tpu_custom_call.1} parent=1 // loop_pre_header
      _
    $region3: #{tpu_custom_call.1} parent=1 // loop_header
      %s16 = sphi 0, %s20
      %p17 = scmp.ge.s32.totalorder %s16, 4
      %s26 = sphi 0, %s28
      %s29 = sphi 0, %s26
      %s30 = sphi 0, %s29
      %s46 = sphi 0, %s30
      %s50 = sphi 0, %s50
      %s52 = sphi 0, %s50
      %s53 = sphi 0, %s52
      %s67 = sphi 0, %s53
      %s71 = sphi 0, %s71
      %s73 = sphi 0, %s71
      %s74 = sphi 0, %s73
      %s88 = sphi 0, %s74
      %s94 = sphi 0, %s96
      %s97 = sphi 0, %s94
      %s98 = sphi 0, %s97
      %s114 = sphi 0, %s98
    $region4: #{tpu_custom_call.1} parent=1 // loop_header_branch
      %19 = sbr.rel (%p17) target = $region8
    $region5: #{tpu_custom_call.1} parent=1 // loop_body
      %s21 = ssub.s32 %s16, 1
      %s22 = ssub.s32 %s16, 2
      %s23 = sadd.s32 %s16, 1
      %s24 = ssub.s32 %s16, %s23
      %p25 = scmp.eq.s32.totalorder %s24, 0
      %s27 = sadd.s32 %s26, 1
      %s28 = scalar_select %p25, %s26, %s27
      %p31 = pneg %p25
      %p32 = scmp.eq.s32.totalorder %s16, 1
      %p33 = por %p31, %p32
      %p34 = scmp.ne.s32.totalorder %s26, %s29
      %p35 = scmp.eq.s32.totalorder %s16, 0
      %p36 = por %p34, %p35
      %p37 = scmp.ne.s32.totalorder %s26, %s29
      %p38 = scmp.eq.s32.totalorder %s21, 1
      %p39 = por %p37, %p38
      %p40 = scmp.ne.s32.totalorder %s29, %s30
      %p41 = scmp.eq.s32.totalorder %s21, 0
      %p42 = por %p40, %p41
      %p43 = scmp.ne.s32.totalorder %s29, %s30
      %p44 = scmp.eq.s32.totalorder %s22, 1
      %p45 = por %p43, %p44
      %p47 = scmp.ne.s32.totalorder %s30, %s46
      %p48 = scmp.eq.s32.totalorder %s22, 0
      %p49 = por %p47, %p48
      %s51 = sadd.s32 %s50, 1
      %p54 = scmp.eq.s32.totalorder %s16, 1
      %p55 = scmp.ne.s32.totalorder %s50, %s52
      %p56 = scmp.eq.s32.totalorder %s16, 0
      %p57 = por %p55, %p56
      %p58 = scmp.ne.s32.totalorder %s50, %s52
      %p59 = scmp.eq.s32.totalorder %s21, 1
      %p60 = por %p58, %p59
      %p61 = scmp.ne.s32.totalorder %s52, %s53
      %p62 = scmp.eq.s32.totalorder %s21, 0
      %p63 = por %p61, %p62
      %p64 = scmp.ne.s32.totalorder %s52, %s53
      %p65 = scmp.eq.s32.totalorder %s22, 1
      %p66 = por %p64, %p65
      %p68 = scmp.ne.s32.totalorder %s53, %s67
      %p69 = scmp.eq.s32.totalorder %s22, 0
      %p70 = por %p68, %p69
      %s72 = sadd.s32 %s71, 1
      %p75 = scmp.eq.s32.totalorder %s16, 1
      %p76 = scmp.ne.s32.totalorder %s71, %s73
      %p77 = scmp.eq.s32.totalorder %s16, 0
      %p78 = por %p76, %p77
      %p79 = scmp.ne.s32.totalorder %s71, %s73
      %p80 = scmp.eq.s32.totalorder %s21, 1
      %p81 = por %p79, %p80
      %p82 = scmp.ne.s32.totalorder %s73, %s74
      %p83 = scmp.eq.s32.totalorder %s21, 0
      %p84 = por %p82, %p83
      %p85 = scmp.ne.s32.totalorder %s73, %s74
      %p86 = scmp.eq.s32.totalorder %s22, 1
      %p87 = por %p85, %p86
      %p89 = scmp.ne.s32.totalorder %s74, %s88
      %p90 = scmp.eq.s32.totalorder %s22, 0
      %p91 = por %p89, %p90
      %s92 = ssub.s32 %s16, %s23
      %p93 = scmp.eq.s32.totalorder %s92, 0
      %s95 = sadd.s32 %s94, 1
      %s96 = scalar_select %p93, %s94, %s95
      %p99 = pneg %p93
      %p100 = scmp.eq.s32.totalorder %s16, 1
      %p101 = por %p99, %p100
      %p102 = scmp.ne.s32.totalorder %s94, %s97
      %p103 = scmp.eq.s32.totalorder %s16, 0
      %p104 = por %p102, %p103
      %p105 = scmp.ne.s32.totalorder %s94, %s97
      %p106 = scmp.eq.s32.totalorder %s21, 1
      %p107 = por %p105, %p106
      %p108 = scmp.ne.s32.totalorder %s97, %s98
      %p109 = scmp.eq.s32.totalorder %s21, 0
      %p110 = por %p108, %p109
      %p111 = scmp.ne.s32.totalorder %s97, %s98
      %p112 = scmp.eq.s32.totalorder %s22, 1
      %p113 = por %p111, %p112
      %p115 = scmp.ne.s32.totalorder %s98, %s114
      %p116 = scmp.eq.s32.totalorder %s22, 0
      %p117 = por %p115, %p116
      %p118 = scmp.le.s32.totalorder 1, %s16
      %p119 = scmp.lt.s32.totalorder %s16, 3
      %p120 = pnand %p118, %p119
      %p121 = pneg %p120
      // Predicated region
      $region9: #{tpu_custom_call.1} parent=5 // pred_check
        _
      $region10: #{tpu_custom_call.1} parent=5 // pred_check_branch
        %123 = sbr.rel (%p120) target = $region12
      $region11: #{tpu_custom_call.1} parent=5 // pred_region
        %s124 = ssub.s32 %s16, 1
        // Predicated region
        $region13: #{tpu_custom_call.1} parent=11 // pred_check
          %p125 = pneg %p63
        $region14: #{tpu_custom_call.1} parent=11 // pred_check_branch
          %127 = sbr.rel (%p125) target = $region16
        $region15: #{tpu_custom_call.1} parent=11 // pred_region
          %s129 = ssub.s32 512, 512
          %130 = vsyncadd [#allocation6], %s129
          %s131 = sshll.u32 [#allocation5], 4
          %s132 = int_to_ptr.vmem [resolvable:$true] %s131
          %137 = dma.hbm_to_vmem [thread:$0]  %s1, 512, %s132, [#allocation6], 128, 128, 8
        $region16: #{tpu_custom_call.1} parent=11 // pred_fallthru
          _
        // Predicated region
        $region17: #{tpu_custom_call.1} parent=11 // pred_check
          %p138 = pneg %p84
        $region18: #{tpu_custom_call.1} parent=11 // pred_check_branch
          %140 = sbr.rel (%p138) target = $region20
        $region19: #{tpu_custom_call.1} parent=11 // pred_region
          _
        $region20: #{tpu_custom_call.1} parent=11 // pred_fallthru
          _
      $region12: #{tpu_custom_call.1} parent=5 // pred_fallthru
        _
      %p141 = scmp.lt.s32.totalorder %s16, 2
      // Predicated region
      $region21: #{tpu_custom_call.1} parent=5 // pred_check
        %p142 = pneg %p141
      $region22: #{tpu_custom_call.1} parent=5 // pred_check_branch
        %144 = sbr.rel (%p142) target = $region24
      $region23: #{tpu_custom_call.1} parent=5 // pred_region
        // Predicated region
        $region25: #{tpu_custom_call.1} parent=23 // pred_check
          %p145 = pneg %p36
        $region26: #{tpu_custom_call.1} parent=23 // pred_check_branch
          %147 = sbr.rel (%p145) target = $region28
        $region27: #{tpu_custom_call.1} parent=23 // pred_region
          %s148 = sand.u32 %s26, 1
          %s149 = scalar_lea.sflag [#allocation3], %s148
          %s150 = sand.u32 %s26, 1
          %s151 = smul.addr %s150, 8
          %s152 = scalar_lea.vmem [#allocation2], %s151
          %s154 = ssub.s32 128, 128
          %155 = vsyncadd %s149, %s154
          %s156 = smul.addr %s16, 128
          %s157 = scalar_lea.hbm %s0, %s156
          %s159 = sshll.u32 %s152, 4
          %s160 = int_to_ptr.vmem [resolvable:$true] %s159
          %162 = dma.hbm_to_vmem [thread:$0]  %s157, 128, %s160, %s149
        $region28: #{tpu_custom_call.1} parent=23 // pred_fallthru
          _
      $region24: #{tpu_custom_call.1} parent=5 // pred_fallthru
        _
      %p163 = scmp.le.s32.totalorder 1, %s16
      %p164 = scmp.lt.s32.totalorder %s16, 3
      %p165 = pnand %p163, %p164
      %p166 = pneg %p165
      // Predicated region
      $region29: #{tpu_custom_call.1} parent=5 // pred_check
        _
      $region30: #{tpu_custom_call.1} parent=5 // pred_check_branch
        %168 = sbr.rel (%p165) target = $region32
      $region31: #{tpu_custom_call.1} parent=5 // pred_region
        %s169 = ssub.s32 %s16, 1
        %s170 = sand.u32 %s29, 1
        %s171 = scalar_lea.sflag [#allocation3], %s170
        %s172 = sand.u32 %s29, 1
        %s173 = smul.addr %s172, 8
        %s174 = scalar_lea.vmem [#allocation2], %s173
        // Predicated region
        $region33: #{tpu_custom_call.1} parent=31 // pred_check
          %p175 = pneg %p42
        $region34: #{tpu_custom_call.1} parent=31 // pred_check_branch
          %177 = sbr.rel (%p175) target = $region36
        $region35: #{tpu_custom_call.1} parent=31 // pred_region
          %178 = dma.done %s171, 128
        $region36: #{tpu_custom_call.1} parent=31 // pred_fallthru
          _
        // Predicated region
        $region37: #{tpu_custom_call.1} parent=31 // pred_check
          %p179 = pneg %p63
        $region38: #{tpu_custom_call.1} parent=31 // pred_check_branch
          %181 = sbr.rel (%p179) target = $region40
        $region39: #{tpu_custom_call.1} parent=31 // pred_region
          %182 = dma.done [#allocation6], 512
        $region40: #{tpu_custom_call.1} parent=31 // pred_fallthru
          _
        %s183 = sand.u32 %s29, 1
        %s184 = scalar_lea.sflag [#allocation3], %s183
        %s185 = sand.u32 %s29, 1
        %s186 = smul.addr %s185, 8
        %s187 = scalar_lea.vmem [#allocation2], %s186
        %p188 = pneg %p42
        %p189 = pneg %p39
        %p190 = pneg %p63
        %p191 = pneg %p60
        %p192 = pneg %p84
        %p193 = pneg %p81
        %p194 = pneg %p110
        %p195 = pneg %p107
        %s196 = sand.u32 %s97, 1
        %s197 = scalar_lea.sflag [#allocation4], %s196
        %s198 = sand.u32 %s97, 1
        %s199 = smul.addr %s198, 8
        %s200 = scalar_lea.vmem [#allocation7], %s199
        %v201 = vld [vmem:[%s174] sm:$0xff]
        %v202 = vld [vmem:[#allocation5] sm:$0xff]
        %v203 = vld [vmem:[#allocation5 + $0x8] sm:$0xff]
        %v204 = vld [vmem:[#allocation5 + $0x10] sm:$0xff]
        %v205 = vld [vmem:[#allocation5 + $0x18] sm:$0xff]
        %v206 = vld [vmem:[%s2] sm:$0x1]
        %v208 = vlaneseq
        %v209 = vshrl.u32 %v208, 7
        %v210 = vsub.s32 0, %v209
        %v211 = vrot.slane %v206, %v210
        %vm213 = vcmask 261120
        %v215 = vsel %vm213, %v201, 0
        %217 = vmatprep.subr.mxu0 0.0
        %218 = vmatpush1.msra.mxu0 0.0
        %219 = vmatprep.subr.mxu0 0.0
        %220 = vmatpush1.msra.mxu0 0.0
        %221 = vmatprep.subr.mxu0 0.0
        %222 = vmatpush1.msra.mxu0 0.0
        %223 = vmatprep.subr.mxu0 0.0
        %224 = vmatpush1.msra.mxu0 0.0
        %225 = vmatprep.subr.mxu0 0.0
        %226 = vmatpush1.msra.mxu0 0.0
        %227 = vmatprep.subr.mxu0 0.0
        %228 = vmatpush1.msra.mxu0 0.0
        %229 = vmatprep.subr.mxu0 0.0
        %230 = vmatpush1.msra.mxu0 0.0
        %231 = vmatprep.subr.mxu0 0.0
        %232 = vmatpush1.msra.mxu0 0.0
        %233 = vmatprep.subr.mxu0 0.0
        %234 = vmatpush1.msra.mxu0 0.0
        %235 = vmatprep.subr.mxu0 0.0
        %236 = vmatpush1.msra.mxu0 0.0
        %237 = vmatprep.subr.mxu0 0.0
        %238 = vmatpush1.msra.mxu0 0.0
        %239 = vmatprep.subr.mxu0 0.0
        %240 = vmatpush1.msra.mxu0 0.0
        %241 = vmatprep.subr.mxu0 0.0
        %242 = vmatpush1.msra.mxu0 %v205
        %243 = vmatprep.subr.mxu0 0.0
        %244 = vmatpush1.msra.mxu0 %v204
        %245 = vmatprep.subr.mxu0 0.0
        %246 = vmatpush1.msra.mxu0 %v203
        %247 = vmatprep.subr.mxu0 0.0
        %248 = vmatpush1.msra.mxu0 %v202
        %249 = vmatprep.subr.mxu0 0.0
        %250 = vmatpush2.msra.mxu0 0.0
        %251 = vmatprep.subr.mxu0 0.0
        %252 = vmatpush2.msra.mxu0 0.0
        %253 = vmatprep.subr.mxu0 0.0
        %254 = vmatpush2.msra.mxu0 0.0
        %255 = vmatprep.subr.mxu0 0.0
        %256 = vmatpush2.msra.mxu0 0.0
        %257 = vmatprep.subr.mxu0 0.0
        %258 = vmatpush2.msra.mxu0 0.0
        %259 = vmatprep.subr.mxu0 0.0
        %260 = vmatpush2.msra.mxu0 0.0
        %261 = vmatprep.subr.mxu0 0.0
        %262 = vmatpush2.msra.mxu0 0.0
        %263 = vmatprep.subr.mxu0 0.0
        %264 = vmatpush2.msra.mxu0 0.0
        %265 = vmatprep.subr.mxu0 0.0
        %266 = vmatpush2.msra.mxu0 0.0
        %267 = vmatprep.subr.mxu0 0.0
        %268 = vmatpush2.msra.mxu0 0.0
        %269 = vmatprep.subr.mxu0 0.0
        %270 = vmatpush2.msra.mxu0 0.0
        %271 = vmatprep.subr.mxu0 0.0
        %272 = vmatpush2.msra.mxu0 0.0
        %273 = vmatprep.subr.mxu0 0.0
        %274 = vmatpush2.msra.mxu0 0.0
        %275 = vmatprep.subr.mxu0 0.0
        %276 = vmatpush2.msra.mxu0 0.0
        %277 = vmatprep.subr.mxu0 0.0
        %278 = vmatpush2.msra.mxu0 0.0
        %279 = vmatprep.subr.mxu0 0.0
        %280 = vmatpush2.msra.mxu0 0.0
        %281 = vmatprep.mubr.f32.mxu0 0.0
        %282 = vmatmul.mubr.f32.gmra.mxu0 %v215
        %v283 = vpop.f32.mrf.mxu0
        %v284 = vadd.f32 %v211, %v283
        %v285 = vpop.f32.mrf.mxu0
        %286 = vdwg.mxu0
        %v287 = vmax.f32 %v284, 0.0
        %vm288 = vcmask 97280
        %289 = vst.msk [vmem:[%s200] sm:$0xff] %vm288, %v287
        %s290 = sand.u32 %s97, 1
        %s291 = scalar_lea.sflag [#allocation4], %s290
        %s292 = sand.u32 %s97, 1
        %s293 = smul.addr %s292, 8
        %s294 = scalar_lea.vmem [#allocation7], %s293
        // Predicated region
        $region41: #{tpu_custom_call.1} parent=31 // pred_check
          %p295 = pneg %p107
        $region42: #{tpu_custom_call.1} parent=31 // pred_check_branch
          %297 = sbr.rel (%p295) target = $region44
        $region43: #{tpu_custom_call.1} parent=31 // pred_region
          %s299 = ssub.s32 128, 128
          %300 = vsyncadd %s291, %s299
          %s301 = smul.addr %s21, 128
          %s302 = scalar_lea.hbm %s3, %s301
          %s304 = sshll.u32 %s294, 4
          %s305 = int_to_ptr.vmem [resolvable:$true] %s304
          %307 = dma.vmem_to_hbm [thread:$0]  %s305, 128, %s302, %s291
        $region44: #{tpu_custom_call.1} parent=31 // pred_fallthru
          _
      $region32: #{tpu_custom_call.1} parent=5 // pred_fallthru
        _
      %p308 = scmp.le.s32.totalorder 2, %s16
      // Predicated region
      $region45: #{tpu_custom_call.1} parent=5 // pred_check
        %p309 = pneg %p308
      $region46: #{tpu_custom_call.1} parent=5 // pred_check_branch
        %311 = sbr.rel (%p309) target = $region48
      $region47: #{tpu_custom_call.1} parent=5 // pred_region
        %s312 = ssub.s32 %s16, 2
        // Predicated region
        $region49: #{tpu_custom_call.1} parent=47 // pred_check
          %p313 = pneg %p113
        $region50: #{tpu_custom_call.1} parent=47 // pred_check_branch
          %315 = sbr.rel (%p313) target = $region52
        $region51: #{tpu_custom_call.1} parent=47 // pred_region
          %s316 = sand.u32 %s98, 1
          %s317 = scalar_lea.sflag [#allocation4], %s316
          %s318 = sand.u32 %s98, 1
          %s319 = smul.addr %s318, 8
          %s320 = scalar_lea.vmem [#allocation7], %s319
          %321 = dma.done %s317, 128
        $region52: #{tpu_custom_call.1} parent=47 // pred_fallthru
          _
      $region48: #{tpu_custom_call.1} parent=5 // pred_fallthru
        _
    $region6: #{tpu_custom_call.1} parent=1 // loop_footer
      %s20 = sadd.s32 1, %s16
    $region7: #{tpu_custom_call.1} parent=1 // loop_footer_branch
      %15 = sbr.rel target = $region3
    $region8: #{tpu_custom_call.1} parent=1 // loop_exit
      _
    %322 = vsyncpa [#allocation3], 1
    %s323 = scalar_lea.sflag [#allocation3], 1
    %324 = vsyncpa %s323, 1
    %325 = vsyncpa [#allocation6], 1
    %326 = vsyncpa [#allocation4], 1
    %s327 = scalar_lea.sflag [#allocation4], 1
    %328 = vsyncpa %s327, 1

</llo_original>
